<compile_context>
chip_gen: v6e
topology: v6e:2x2x1
jax: 0.10.0
libtpu: 0.0.40
codegen_flags: <defaults>
</compile_context>

<pallas_src>
import jax
import jax.numpy as jnp
from jax.experimental import pallas as pl
from jax.experimental.pallas import tpu as pltpu


# ---------------------------------------------------------------------------
# Kernels
# ---------------------------------------------------------------------------

def _gcn_fused_kernel(a_ref, xw_ref, b1_ref, w2t_ref, b2_ref, out_ref):
    """Both layers in one pass over A (A resident in VMEM).

    h   = relu(A @ XW + b1)
    out = sigmoid((A @ h) @ W2 + b2), emitted as a lane-dense (1, N) slab.
    """
    a = a_ref[...]                                                   # (N, N) bf16

    # Layer 1 (f32 accumulation on the MXU, f32 bias + relu on the VPU).
    h = jnp.dot(a, xw_ref[...], preferred_element_type=jnp.float32)  # (N, H)
    h = jnp.maximum(h + b1_ref[...], 0.0)
    # TODO(synk): F.dropout(training=True) path not implemented; eval mode -> identity.

    # Layer 2, reassociated: keep the big NxN matmul H-wide (lane-dense).
    ah = jnp.dot(a, h.astype(jnp.bfloat16),
                 preferred_element_type=jnp.float32)                 # (N, H)
    # (1, H) x (N, H) contracted on H -> (1, N): lane-dense output.
    z = jax.lax.dot_general(
        w2t_ref[...], ah,
        dimension_numbers=(((1,), (1,)), ((), ())),
        preferred_element_type=jnp.float32,
    )
    out_ref[...] = jax.nn.sigmoid(z + b2_ref[0, 0])


def _gcn_layer1_kernel(a_ref, xw_ref, b1_ref, h_ref, acc_ref):
    """h[i] = relu( sum_k A[i,k] @ XW[k] + b1 ), accumulated over grid axis 1."""
    k = pl.program_id(1)

    @pl.when(k == 0)
    def _():
        acc_ref[...] = jnp.zeros_like(acc_ref)

    # bf16 x bf16 MXU matmul, f32 accumulation. XW is precomputed in the wrapper.
    acc_ref[...] += jnp.dot(
        a_ref[...], xw_ref[...], preferred_element_type=jnp.float32
    )

    @pl.when(k == pl.num_programs(1) - 1)
    def _():
        h = jnp.maximum(acc_ref[...] + b1_ref[...], 0.0)   # bias + relu in f32
        h_ref[...] = h.astype(h_ref.dtype)


def _gcn_layer2_kernel(a_ref, h_ref, w2t_ref, b2_ref, out_ref, acc_ref):
    """out[i] = sigmoid( (sum_k A[i,k] @ h[k]) @ W2 + b2 ), lane-dense row output."""
    k = pl.program_id(1)

    @pl.when(k == 0)
    def _():
        acc_ref[...] = jnp.zeros_like(acc_ref)

    # Keep the big matmul H-wide (lane-dense); contract with W2 only at the end.
    acc_ref[...] += jnp.dot(
        a_ref[...], h_ref[...], preferred_element_type=jnp.float32
    )

    @pl.when(k == pl.num_programs(1) - 1)
    def _():
        z = jax.lax.dot_general(
            w2t_ref[...], acc_ref[...],
            dimension_numbers=(((1,), (1,)), ((), ())),
            preferred_element_type=jnp.float32,
        )
        out_ref[...] = jax.nn.sigmoid(z + b2_ref[0, 0])


# ---------------------------------------------------------------------------
# Wrapper
# ---------------------------------------------------------------------------

_VMEM_LIMIT = 32 * 1024 * 1024   # raises v5e's 16 MiB default, safe on v7x's 64 MiB


def _round_up(n, m):
    return ((n + m - 1) // m) * m


def _pick_tile(n, cap):
    """Largest power-of-two tile <= cap dividing n (n must be a multiple of 128)."""
    t = cap
    while t > 128 and n % t != 0:
        t //= 2
    return t


def two_layer_gcn_forward(a_norm, x, w1, b1, w2, b2, *, tm=None, tk=None,
                          fuse_threshold=2048):
    """a_norm: (N, N), x: (N, F), w1: (F, H), b1: (1, H), w2: (H, 1), b2: (1, 1)."""
    n, _ = x.shape
    h_dim = w1.shape[1]

    # bf16 adjacency halves HBM traffic on the mem-bound A matmuls; ideally it
    # already arrives bf16 from build_normalized_adjacency (no extra cast pass).
    a_bf = a_norm if a_norm.dtype == jnp.bfloat16 else a_norm.astype(jnp.bfloat16)

    # Hoisted feature projection: XW = x @ W1, computed once, cast to bf16 once.
    xw = jnp.dot(
        x.astype(jnp.float32), w1.astype(jnp.float32),
        precision=jax.lax.Precision.HIGHEST,
    ).astype(jnp.bfloat16)                                           # (N, H)

    b1f = jnp.reshape(b1, (1, h_dim)).astype(jnp.float32)
    w2t = jnp.reshape(w2, (1, h_dim)).astype(jnp.float32)            # W2^T
    b2f = jnp.reshape(b2, (1, 1)).astype(jnp.float32)

    # ---- Small graphs: single fused kernel, A resident in VMEM (one A pass) --
    if n <= fuse_threshold:
        out_t = pl.pallas_call(
            _gcn_fused_kernel,
            out_shape=jax.ShapeDtypeStruct((1, n), jnp.float32),
            in_specs=[
                pl.BlockSpec(memory_space=pltpu.MemorySpace.VMEM),   # A (bf16)
                pl.BlockSpec(memory_space=pltpu.MemorySpace.VMEM),   # XW (bf16)
                pl.BlockSpec(memory_space=pltpu.MemorySpace.VMEM),   # b1
                pl.BlockSpec(memory_space=pltpu.MemorySpace.VMEM),   # W2^T
                pl.BlockSpec(memory_space=pltpu.MemorySpace.SMEM),   # b2 scalar
            ],
            out_specs=pl.BlockSpec(memory_space=pltpu.MemorySpace.VMEM),
            compiler_params=pltpu.CompilerParams(vmem_limit_bytes=_VMEM_LIMIT),
            cost_estimate=pl.CostEstimate(
                flops=4 * n * n * h_dim + 2 * n * h_dim,
                transcendentals=n,
                bytes_accessed=2 * n * n + 4 * n * h_dim + 4 * n,
            ),
        )(a_bf, xw, b1f, w2t, b2f)
        return out_t.reshape(n, 1)

    # ---- Large graphs: two tiled pallas_calls (A streamed once per layer) ----
    # Pad to a multiple of 128: zero rows/cols in A and zero rows in XW are
    # inert (padded h rows never feed real outputs since padded A columns = 0).
    n_pad = _round_up(n, 128)
    if n_pad != n:
        a_bf = jnp.pad(a_bf, ((0, n_pad - n), (0, n_pad - n)))
        xw = jnp.pad(xw, ((0, n_pad - n), (0, 0)))

    if tm is None or n_pad % tm != 0:
        tm = _pick_tile(n_pad, 512)
    if tk is None or n_pad % tk != 0:
        tk = _pick_tile(n_pad, 2048)
    nm, nk = n_pad // tm, n_pad // tk

    compiler_params = pltpu.CompilerParams(
        dimension_semantics=("parallel", "arbitrary"),   # rows parallel, reduction last
        vmem_limit_bytes=_VMEM_LIMIT,
    )

    # ---- Layer 1: h = relu(A_norm @ XW + b1), h stored in bf16 --------------
    h = pl.pallas_call(
        _gcn_layer1_kernel,
        out_shape=jax.ShapeDtypeStruct((n_pad, h_dim), jnp.bfloat16),
        grid_spec=pltpu.PrefetchScalarGridSpec(
            num_scalar_prefetch=0,
            grid=(nm, nk),
            in_specs=[
                pl.BlockSpec((tm, tk), lambda i, k: (i, k)),       # A tile (bf16)
                pl.BlockSpec((tk, h_dim), lambda i, k: (k, 0)),    # XW column block
                pl.BlockSpec((1, h_dim), lambda i, k: (0, 0)),     # b1 (resident)
            ],
            out_specs=pl.BlockSpec((tm, h_dim), lambda i, k: (i, 0)),
            scratch_shapes=[pltpu.VMEM((tm, h_dim), jnp.float32)],
        ),
        compiler_params=compiler_params,
        cost_estimate=pl.CostEstimate(
            flops=2 * n_pad * n_pad * h_dim,
            transcendentals=0,
            bytes_accessed=2 * n_pad * n_pad + 2 * n_pad * h_dim * nm
            + 2 * n_pad * h_dim,
        ),
    )(a_bf, xw, b1f)

    # TODO(synk): F.dropout(training=True) path not implemented; eval mode -> identity.

    # ---- Layer 2: out = sigmoid((A_norm @ h) @ W2 + b2), lane-dense (1, N) --
    out_t = pl.pallas_call(
        _gcn_layer2_kernel,
        out_shape=jax.ShapeDtypeStruct((1, n_pad), jnp.float32),
        grid_spec=pltpu.PrefetchScalarGridSpec(
            num_scalar_prefetch=0,
            grid=(nm, nk),
            in_specs=[
                pl.BlockSpec((tm, tk), lambda i, k: (i, k)),        # A tile (bf16)
                pl.BlockSpec((tk, h_dim), lambda i, k: (k, 0)),     # h column block
                pl.BlockSpec((1, h_dim), lambda i, k: (0, 0)),      # W2^T (resident)
                pl.BlockSpec(memory_space=pltpu.MemorySpace.SMEM),  # b2 scalar in SMEM
            ],
            out_specs=pl.BlockSpec((1, tm), lambda i, k: (0, i)),
            scratch_shapes=[pltpu.VMEM((tm, h_dim), jnp.float32)],
        ),
        compiler_params=compiler_params,
        cost_estimate=pl.CostEstimate(
            flops=2 * n_pad * n_pad * h_dim + 2 * n_pad * h_dim,
            transcendentals=n_pad,
            bytes_accessed=2 * n_pad * n_pad + 2 * n_pad * h_dim * nm + 4 * n_pad,
        ),
    )(a_bf, h, w2t, b2f)

    return out_t.reshape(n_pad, 1)[:n, :]


# ---------------------------------------------------------------------------
# Glue: dense normalized adjacency from edge_index (plain JAX)
# ---------------------------------------------------------------------------
# TODO(synk): for realistic graphs (E << N^2) a sparse gather / segment-sum
# aggregation driven by scalar-prefetched CSR offsets would replace this dense
# O(N^2) adjacency; dense form kept here for the toy demo.

def build_normalized_adjacency(edge_index, num_nodes, dtype=jnp.bfloat16):
    """Dense D^{-1/2}(A+I)D^{-1/2} from a (2, E) edge_index, emitted in `dtype`."""
    src = edge_index[0]
    dst = edge_index[1]
    a = jnp.zeros((num_nodes, num_nodes), dtype=jnp.float32)
    # messages flow src -> dst, aggregated at dst; duplicates accumulate (scatter-add).
    a = a.at[dst, src].add(1.0)
    a = a + jnp.eye(num_nodes, dtype=jnp.float32)        # add self loops
    deg = jnp.sum(a, axis=1)
    d_inv_sqrt = jnp.where(deg > 0, jax.lax.rsqrt(deg), 0.0)
    # cast fused with the scaling (no extra full pass over N^2 afterwards)
    return (d_inv_sqrt[:, None] * a * d_inv_sqrt[None, :]).astype(dtype)


def reference_forward(a_norm, x, w1, b1, w2, b2):
    hp = jax.lax.Precision.HIGHEST
    h = jnp.maximum(
        jnp.dot(a_norm, jnp.dot(x, w1, precision=hp), precision=hp) + b1, 0.0
    )
    z = jnp.dot(jnp.dot(a_norm, h, precision=hp), w2, precision=hp) + b2
    return jax.nn.sigmoid(z)


if __name__ == "__main__":
    key = jax.random.PRNGKey(0)
    num_nodes = 256
    input_dim = 16
    hidden_dim = 32
    num_edges = 1024

    k_x, k_e1, k_e2, k_w1, k_w2 = jax.random.split(key, 5)

    # Node feature matrix (N, F) and random edge_index (2, E) without self loops
    x = jax.random.normal(k_x, (num_nodes, input_dim), dtype=jnp.float32)
    src = jax.random.randint(k_e1, (num_edges,), 0, num_nodes)
    off = jax.random.randint(k_e2, (num_edges,), 1, num_nodes)
    dst = (src + off) % num_nodes
    edge_index = jnp.stack([src, dst], axis=0)

    # Deterministic parameter init (glorot-ish scale, zero bias as in GCNConv)
    w1 = jax.random.normal(k_w1, (input_dim, hidden_dim), dtype=jnp.float32) * (
        1.0 / jnp.sqrt(input_dim)
    )
    b1 = jnp.zeros((1, hidden_dim), dtype=jnp.float32)
    w2 = jax.random.normal(k_w2, (hidden_dim, 1), dtype=jnp.float32) * (
        1.0 / jnp.sqrt(hidden_dim)
    )
    b2 = jnp.zeros((1, 1), dtype=jnp.float32)

    a_bf16 = build_normalized_adjacency(edge_index, num_nodes)                  # kernel
    a_f32 = build_normalized_adjacency(edge_index, num_nodes, jnp.float32)      # reference

    # ---- Test 1: demo size (N=256) -> fused single-pass kernel -------------
    out = jax.block_until_ready(two_layer_gcn_forward(a_bf16, x, w1, b1, w2, b2))
    ref = reference_forward(a_f32, x, w1, b1, w2, b2)
    assert out.shape == (num_nodes, 1)
    assert bool(jnp.all(jnp.isfinite(out)))
    # bf16 adjacency / intermediates -> loosened tolerance vs f32 reference.
    assert float(jnp.max(jnp.abs(out - ref))) < 5e-2

    # ---- Test 2: force the tiled two-pass path + 128-padding (N=200) -------
    n2 = 200
    x2 = x[:n2]
    k_e3, k_e4 = jax.random.split(jax.random.PRNGKey(1), 2)
    src2 = jax.random.randint(k_e3, (512,), 0, n2)
    off2 = jax.random.randint(k_e4, (512,), 1, n2)
    dst2 = (src2 + off2) % n2
    ei2 = jnp.stack([src2, dst2], axis=0)
    a2_bf16 = build_normalized_adjacency(ei2, n2)
    a2_f32 = build_normalized_adjacency(ei2, n2, jnp.float32)

    out2 = two_layer_gcn_forward(
        a2_bf16, x2, w1, b1, w2, b2, tm=128, tk=128, fuse_threshold=0
    )
    out2 = jax.block_until_ready(out2)
    ref2 = reference_forward(a2_f32, x2, w1, b1, w2, b2)
    assert out2.shape == (n2, 1)
    assert bool(jnp.all(jnp.isfinite(out2)))
    assert float(jnp.max(jnp.abs(out2 - ref2))) < 5e-2

    print("KERNEL_OK")
</pallas_src>

<mosaic_0001>
module attributes {stable_mosaic.version = 11 : i64} {
  func.func @_gcn_fused_kernel(%arg0: memref<256x256xbf16, #tpu.memory_space<vmem>>, %arg1: memref<256x32xbf16, #tpu.memory_space<vmem>>, %arg2: memref<1x32xf32, #tpu.memory_space<vmem>>, %arg3: memref<1x32xf32, #tpu.memory_space<vmem>>, %arg4: memref<1x1xf32, #tpu.memory_space<smem>>, %arg5: memref<1x256xf32, #tpu.memory_space<vmem>>) attributes {dimension_semantics = [], scalar_prefetch = 0 : i64, scratch_operands = 0 : i64, tpu.core_type = #tpu.core_type<tc>} {
    %c0 = arith.constant 0 : index
    %c0_0 = arith.constant 0 : index
    %0 = vector.load %arg0[%c0, %c0_0] : memref<256x256xbf16, #tpu.memory_space<vmem>>, vector<256x256xbf16>
    %c0_1 = arith.constant 0 : index
    %c0_2 = arith.constant 0 : index
    %1 = vector.load %arg1[%c0_1, %c0_2] : memref<256x32xbf16, #tpu.memory_space<vmem>>, vector<256x32xbf16>
    %cst = arith.constant dense<0.000000e+00> : vector<256x32xf32>
    %2 = tpu.matmul %0, %1, %cst {dimension_numbers = #tpu.dot_dimension_numbers<[1], [0], [0], [1], [0, 0, 1, 1], [], []>} : vector<256x256xbf16>, vector<256x32xbf16>, vector<256x32xf32> -> vector<256x32xf32>
    %c0_3 = arith.constant 0 : index
    %c0_4 = arith.constant 0 : index
    %3 = vector.load %arg2[%c0_3, %c0_4] : memref<1x32xf32, #tpu.memory_space<vmem>>, vector<1x32xf32>
    %4 = vector.broadcast %3 : vector<1x32xf32> to vector<256x32xf32>
    %5 = arith.addf %2, %4 : vector<256x32xf32>
    %cst_5 = arith.constant 0.000000e+00 : f32
    %6 = vector.broadcast %cst_5 : f32 to vector<256x32xf32>
    %7 = arith.maximumf %5, %6 : vector<256x32xf32>
    %8 = arith.truncf %7 : vector<256x32xf32> to vector<256x32xbf16>
    %cst_6 = arith.constant dense<0.000000e+00> : vector<256x32xf32>
    %9 = tpu.matmul %0, %8, %cst_6 {dimension_numbers = #tpu.dot_dimension_numbers<[1], [0], [0], [1], [0, 0, 1, 1], [], []>} : vector<256x256xbf16>, vector<256x32xbf16>, vector<256x32xf32> -> vector<256x32xf32>
    %c0_7 = arith.constant 0 : index
    %c0_8 = arith.constant 0 : index
    %10 = vector.load %arg3[%c0_7, %c0_8] : memref<1x32xf32, #tpu.memory_space<vmem>>, vector<1x32xf32>
    %cst_9 = arith.constant dense<0.000000e+00> : vector<1x256xf32>
    %11 = tpu.matmul %10, %9, %cst_9 {dimension_numbers = #tpu.dot_dimension_numbers<[1], [1], [0], [0], [0, 0, 1, 0], [], []>} : vector<1x32xf32>, vector<256x32xf32>, vector<1x256xf32> -> vector<1x256xf32>
    %c0_10 = arith.constant 0 : index
    %c0_11 = arith.constant 0 : index
    %12 = memref.load %arg4[%c0_10, %c0_11] : memref<1x1xf32, #tpu.memory_space<smem>>
    %13 = vector.broadcast %12 : f32 to vector<1x256xf32>
    %14 = arith.addf %11, %13 : vector<1x256xf32>
    %15 = arith.negf %14 : vector<1x256xf32>
    %16 = math.exp %15 : vector<1x256xf32>
    %cst_12 = arith.constant 1.000000e+00 : f32
    %17 = vector.broadcast %cst_12 : f32 to vector<1x256xf32>
    %18 = arith.addf %17, %16 : vector<1x256xf32>
    %19 = arith.divf %17, %18 : vector<1x256xf32>
    %c0_13 = arith.constant 0 : index
    %c0_14 = arith.constant 0 : index
    %20 = vector.load %arg5[%c0_13, %c0_14] : memref<1x256xf32, #tpu.memory_space<vmem>>, vector<1x256xf32>
    tpu.vector_store %arg5[%c0_13, %c0_14], %19 {strides = array<i32>} : memref<1x256xf32, #tpu.memory_space<vmem>>, vector<1x256xf32>,
    return
  }
}

</mosaic_0001>

<llo_original>
// kernel: tpu_custom_call.1
$region0: #{tpu_custom_call.1}
  #allocation0 [shape = 'u32[]', space=smem, size = 0x4, offset = 0x4, fixed_abs, tag = 'smem constant byte address 0x4 - core index']
  #allocation1 [shape = 'u32[144,128]{1,0:T(1,128)}', space=vmem, size = 0x12000, scoped, tag = 'internal scratch']
  #allocation2 [shape = 'f32[1,1]{1,0:T(1,128)S(6)}', space=smem, size = 0x200, scoped, tag = 'scoped memory for tpu_custom_call.1']
  %s0 = inlined_call_operand.hbm [shape: bf16[256,256], index: 0, kind: input, shape index: {}]
  %s1 = inlined_call_operand.vmem [shape: bf16[256,32], index: 1, kind: input, shape index: {}]
  %s2 = inlined_call_operand.vmem [shape: f32[1,32], index: 2, kind: input, shape index: {}]
  %s3 = inlined_call_operand.vmem [shape: f32[1,32], index: 3, kind: input, shape index: {}]
  %s4 = inlined_call_operand.<no memory space> [shape: f32[1,1], index: 4, kind: input, shape index: {}]
  %s5 = inlined_call_operand.hbm [shape: f32[1,256], index: 5, kind: output, shape index: {}]
  %s6 = sld [smem:[#allocation0]]
  $region34: #{tpu_custom_call.1} parent=0
    _
  %s8 = ssub.s32 1, %s6
  %s9 = scalar_select 0, %s8, %s6
  %10 = sst [smem:[#allocation2]] %s4
  $region1: #{tpu_custom_call.1} parent=0
    #allocation3 [shape = 'u8[131072]{0}', space=vmem, size = 0x20000, scoped, tag = 'input window, operand 0, single buffered']
    #allocation4 [shape = 's32[1]{0}', space=sflag, size = 0x4, scoped, tag = 'scoped memory for tpu_custom_call.1']
    #allocation5 [shape = 's32[1]{0}', space=sflag, size = 0x4, scoped, tag = 'scoped memory for tpu_custom_call.1']
    #allocation6 [shape = 'u8[1024]{0}', space=vmem, size = 0x400, scoped, tag = 'output window, operand 0, single buffered']
    %11 = vsyncpa [#allocation4], 0
    %12 = vsyncpa [#allocation5], 0
    // Predicated region
    $region2: #{tpu_custom_call.1} parent=1 // pred_check
      _
    $region3: #{tpu_custom_call.1} parent=1 // pred_check_branch
      %14 = sbr.rel (0) target = $region5
    $region4: #{tpu_custom_call.1} parent=1 // pred_region
      %s16 = ssub.s32 4096, 4096
      %17 = vsyncadd [#allocation4], %s16
      %s18 = sshll.u32 [#allocation3], 4
      %s19 = int_to_ptr.vmem [resolvable:$true] %s18
      %24 = dma.hbm_to_vmem [thread:$0]  %s0, 4096, %s19, [#allocation4], 128, 128, 8
    $region5: #{tpu_custom_call.1} parent=1 // pred_fallthru
      _
    // Predicated region
    $region6: #{tpu_custom_call.1} parent=1 // pred_check
      _
    $region7: #{tpu_custom_call.1} parent=1 // pred_check_branch
      %26 = sbr.rel (0) target = $region9
    $region8: #{tpu_custom_call.1} parent=1 // pred_region
      _
    $region9: #{tpu_custom_call.1} parent=1 // pred_fallthru
      _
    // Predicated region
    $region10: #{tpu_custom_call.1} parent=1 // pred_check
      _
    $region11: #{tpu_custom_call.1} parent=1 // pred_check_branch
      %28 = sbr.rel (0) target = $region13
    $region12: #{tpu_custom_call.1} parent=1 // pred_region
      _
    $region13: #{tpu_custom_call.1} parent=1 // pred_fallthru
      _
    // Predicated region
    $region14: #{tpu_custom_call.1} parent=1 // pred_check
      _
    $region15: #{tpu_custom_call.1} parent=1 // pred_check_branch
      %30 = sbr.rel (0) target = $region17
    $region16: #{tpu_custom_call.1} parent=1 // pred_region
      _
    $region17: #{tpu_custom_call.1} parent=1 // pred_fallthru
      _
    // Predicated region
    $region18: #{tpu_custom_call.1} parent=1 // pred_check
      _
    $region19: #{tpu_custom_call.1} parent=1 // pred_check_branch
      %32 = sbr.rel (0) target = $region21
    $region20: #{tpu_custom_call.1} parent=1 // pred_region
      _
    $region21: #{tpu_custom_call.1} parent=1 // pred_fallthru
      _
    // Predicated region
    $region22: #{tpu_custom_call.1} parent=1 // pred_check
      _
    $region23: #{tpu_custom_call.1} parent=1 // pred_check_branch
      %34 = sbr.rel (0) target = $region25
    $region24: #{tpu_custom_call.1} parent=1 // pred_region
      %35 = dma.done [#allocation4], 4096
    $region25: #{tpu_custom_call.1} parent=1 // pred_fallthru
      _
    %v37 = vld [vmem:[#allocation3] sm:$0xff]
    %v38 = vld [vmem:[#allocation3 + $0x8] sm:$0xff]
    %v39 = vld [vmem:[#allocation3 + $0x10] sm:$0xff]
    %v40 = vld [vmem:[#allocation3 + $0x18] sm:$0xff]
    %v41 = vld [vmem:[#allocation3 + $0x20] sm:$0xff]
    %v42 = vld [vmem:[#allocation3 + $0x28] sm:$0xff]
    %v43 = vld [vmem:[#allocation3 + $0x30] sm:$0xff]
    %v44 = vld [vmem:[#allocation3 + $0x38] sm:$0xff]
    %v45 = vld [vmem:[#allocation3 + $0x40] sm:$0xff]
    %v46 = vld [vmem:[#allocation3 + $0x48] sm:$0xff]
    %v47 = vld [vmem:[#allocation3 + $0x50] sm:$0xff]
    %v48 = vld [vmem:[#allocation3 + $0x58] sm:$0xff]
    %v49 = vld [vmem:[#allocation3 + $0x60] sm:$0xff]
    %v50 = vld [vmem:[#allocation3 + $0x68] sm:$0xff]
    %v51 = vld [vmem:[#allocation3 + $0x70] sm:$0xff]
    %v52 = vld [vmem:[#allocation3 + $0x78] sm:$0xff]
    %v53 = vld [vmem:[#allocation3 + $0x80] sm:$0xff]
    %v54 = vld [vmem:[#allocation3 + $0x88] sm:$0xff]
    %v55 = vld [vmem:[#allocation3 + $0x90] sm:$0xff]
    %v56 = vld [vmem:[#allocation3 + $0x98] sm:$0xff]
    %v57 = vld [vmem:[#allocation3 + $0xa0] sm:$0xff]
    %v58 = vld [vmem:[#allocation3 + $0xa8] sm:$0xff]
    %v59 = vld [vmem:[#allocation3 + $0xb0] sm:$0xff]
    %v60 = vld [vmem:[#allocation3 + $0xb8] sm:$0xff]
    %v61 = vld [vmem:[#allocation3 + $0xc0] sm:$0xff]
    %v62 = vld [vmem:[#allocation3 + $0xc8] sm:$0xff]
    %v63 = vld [vmem:[#allocation3 + $0xd0] sm:$0xff]
    %v64 = vld [vmem:[#allocation3 + $0xd8] sm:$0xff]
    %v65 = vld [vmem:[#allocation3 + $0xe0] sm:$0xff]
    %v66 = vld [vmem:[#allocation3 + $0xe8] sm:$0xff]
    %v67 = vld [vmem:[#allocation3 + $0xf0] sm:$0xff]
    %v68 = vld [vmem:[#allocation3 + $0xf8] sm:$0xff]
    %v69 = vld [vmem:[%s1] sm:$0xf]
    %v70 = vld [vmem:[%s1 + $0x4] sm:$0xf]
    %v71 = vld [vmem:[%s1 + $0x8] sm:$0xf]
    %v72 = vld [vmem:[%s1 + $0xc] sm:$0xf]
    %v73 = vld [vmem:[%s1 + $0x10] sm:$0xf]
    %v74 = vld [vmem:[%s1 + $0x14] sm:$0xf]
    %v75 = vld [vmem:[%s1 + $0x18] sm:$0xf]
    %v76 = vld [vmem:[%s1 + $0x1c] sm:$0xf]
    %v77 = vld [vmem:[%s1 + $0x20] sm:$0xf]
    %v78 = vld [vmem:[%s1 + $0x24] sm:$0xf]
    %v79 = vld [vmem:[%s1 + $0x28] sm:$0xf]
    %v80 = vld [vmem:[%s1 + $0x2c] sm:$0xf]
    %v81 = vld [vmem:[%s1 + $0x30] sm:$0xf]
    %v82 = vld [vmem:[%s1 + $0x34] sm:$0xf]
    %v83 = vld [vmem:[%s1 + $0x38] sm:$0xf]
    %v84 = vld [vmem:[%s1 + $0x3c] sm:$0xf]
    %v85 = vld [vmem:[%s1 + $0x40] sm:$0xf]
    %v86 = vld [vmem:[%s1 + $0x44] sm:$0xf]
    %v87 = vld [vmem:[%s1 + $0x48] sm:$0xf]
    %v88 = vld [vmem:[%s1 + $0x4c] sm:$0xf]
    %v89 = vld [vmem:[%s1 + $0x50] sm:$0xf]
    %v90 = vld [vmem:[%s1 + $0x54] sm:$0xf]
    %v91 = vld [vmem:[%s1 + $0x58] sm:$0xf]
    %v92 = vld [vmem:[%s1 + $0x5c] sm:$0xf]
    %v93 = vld [vmem:[%s1 + $0x60] sm:$0xf]
    %v94 = vld [vmem:[%s1 + $0x64] sm:$0xf]
    %v95 = vld [vmem:[%s1 + $0x68] sm:$0xf]
    %v96 = vld [vmem:[%s1 + $0x6c] sm:$0xf]
    %v97 = vld [vmem:[%s1 + $0x70] sm:$0xf]
    %v98 = vld [vmem:[%s1 + $0x74] sm:$0xf]
    %v99 = vld [vmem:[%s1 + $0x78] sm:$0xf]
    %v100 = vld [vmem:[%s1 + $0x7c] sm:$0xf]
    %v101 = vld [vmem:[%s2] sm:$0x1]
    %v103 = vlaneseq
    %v104 = vshrl.u32 %v103, 7
    %v105 = vsub.s32 0, %v104
    %v106 = vrot.slane %v101, %v105
    %v140 = vunpack.c.l.b16 %v37
    %v141 = vunpack.c.h.b16 %v37
    %v142 = vunpack.c.l.b16 %v38
    %v143 = vunpack.c.h.b16 %v38
    %v144 = vunpack.c.l.b16 %v39
    %v145 = vunpack.c.h.b16 %v39
    %v146 = vunpack.c.l.b16 %v40
    %v147 = vunpack.c.h.b16 %v40
    %v148 = vunpack.c.l.b16 %v41
    %v149 = vunpack.c.h.b16 %v41
    %v150 = vunpack.c.l.b16 %v42
    %v151 = vunpack.c.h.b16 %v42
    %v152 = vunpack.c.l.b16 %v43
    %v153 = vunpack.c.h.b16 %v43
    %v154 = vunpack.c.l.b16 %v44
    %v155 = vunpack.c.h.b16 %v44
    %v156 = vunpack.c.l.b16 %v45
    %v157 = vunpack.c.h.b16 %v45
    %v158 = vunpack.c.l.b16 %v46
    %v159 = vunpack.c.h.b16 %v46
    %v160 = vunpack.c.l.b16 %v47
    %v161 = vunpack.c.h.b16 %v47
    %v162 = vunpack.c.l.b16 %v48
    %v163 = vunpack.c.h.b16 %v48
    %v164 = vunpack.c.l.b16 %v49
    %v165 = vunpack.c.h.b16 %v49
    %v166 = vunpack.c.l.b16 %v50
    %v167 = vunpack.c.h.b16 %v50
    %v168 = vunpack.c.l.b16 %v51
    %v169 = vunpack.c.h.b16 %v51
    %v170 = vunpack.c.l.b16 %v52
    %v171 = vunpack.c.h.b16 %v52
    %v172 = vunpack.c.l.b16 %v53
    %v173 = vunpack.c.h.b16 %v53
    %v174 = vunpack.c.l.b16 %v54
    %v175 = vunpack.c.h.b16 %v54
    %v176 = vunpack.c.l.b16 %v55
    %v177 = vunpack.c.h.b16 %v55
    %v178 = vunpack.c.l.b16 %v56
    %v179 = vunpack.c.h.b16 %v56
    %v180 = vunpack.c.l.b16 %v57
    %v181 = vunpack.c.h.b16 %v57
    %v182 = vunpack.c.l.b16 %v58
    %v183 = vunpack.c.h.b16 %v58
    %v184 = vunpack.c.l.b16 %v59
    %v185 = vunpack.c.h.b16 %v59
    %v186 = vunpack.c.l.b16 %v60
    %v187 = vunpack.c.h.b16 %v60
    %v188 = vunpack.c.l.b16 %v61
    %v189 = vunpack.c.h.b16 %v61
    %v190 = vunpack.c.l.b16 %v62
    %v191 = vunpack.c.h.b16 %v62
    %v192 = vunpack.c.l.b16 %v63
    %v193 = vunpack.c.h.b16 %v63
    %v194 = vunpack.c.l.b16 %v64
    %v195 = vunpack.c.h.b16 %v64
    %v196 = vunpack.c.l.b16 %v65
    %v197 = vunpack.c.h.b16 %v65
    %v198 = vunpack.c.l.b16 %v66
    %v199 = vunpack.c.h.b16 %v66
    %v200 = vunpack.c.l.b16 %v67
    %v201 = vunpack.c.h.b16 %v67
    %v202 = vunpack.c.l.b16 %v68
    %v203 = vunpack.c.h.b16 %v68
    %v204 = vpack.c.b16 %v142, %v140
    %v205 = vpack.c.b16 %v143, %v141
    %v206 = vpack.c.b16 %v146, %v144
    %v207 = vpack.c.b16 %v147, %v145
    %v208 = vpack.c.b16 %v150, %v148
    %v209 = vpack.c.b16 %v151, %v149
    %v210 = vpack.c.b16 %v154, %v152
    %v211 = vpack.c.b16 %v155, %v153
    %v212 = vpack.c.b16 %v158, %v156
    %v213 = vpack.c.b16 %v159, %v157
    %v214 = vpack.c.b16 %v162, %v160
    %v215 = vpack.c.b16 %v163, %v161
    %v216 = vpack.c.b16 %v166, %v164
    %v217 = vpack.c.b16 %v167, %v165
    %v218 = vpack.c.b16 %v170, %v168
    %v219 = vpack.c.b16 %v171, %v169
    %v220 = vpack.c.b16 %v174, %v172
    %v221 = vpack.c.b16 %v175, %v173
    %v222 = vpack.c.b16 %v178, %v176
    %v223 = vpack.c.b16 %v179, %v177
    %v224 = vpack.c.b16 %v182, %v180
    %v225 = vpack.c.b16 %v183, %v181
    %v226 = vpack.c.b16 %v186, %v184
    %v227 = vpack.c.b16 %v187, %v185
    %v228 = vpack.c.b16 %v190, %v188
    %v229 = vpack.c.b16 %v191, %v189
    %v230 = vpack.c.b16 %v194, %v192
    %v231 = vpack.c.b16 %v195, %v193
    %v232 = vpack.c.b16 %v198, %v196
    %v233 = vpack.c.b16 %v199, %v197
    %v234 = vpack.c.b16 %v202, %v200
    %v235 = vpack.c.b16 %v203, %v201
    %v300 = vunpack.c.l.b16 %v69
    %v301 = vunpack.c.l.b16 %v70
    %v302 = vunpack.c.l.b16 %v71
    %v303 = vunpack.c.l.b16 %v72
    %v304 = vunpack.c.l.b16 %v73
    %v305 = vunpack.c.l.b16 %v74
    %v306 = vunpack.c.l.b16 %v75
    %v307 = vunpack.c.l.b16 %v76
    %v308 = vunpack.c.l.b16 %v77
    %v309 = vunpack.c.l.b16 %v78
    %v310 = vunpack.c.l.b16 %v79
    %v311 = vunpack.c.l.b16 %v80
    %v312 = vunpack.c.l.b16 %v81
    %v313 = vunpack.c.l.b16 %v82
    %v314 = vunpack.c.l.b16 %v83
    %v315 = vunpack.c.l.b16 %v84
    %v316 = vunpack.c.l.b16 %v85
    %v317 = vunpack.c.l.b16 %v86
    %v318 = vunpack.c.l.b16 %v87
    %v319 = vunpack.c.l.b16 %v88
    %v320 = vunpack.c.l.b16 %v89
    %v321 = vunpack.c.l.b16 %v90
    %v322 = vunpack.c.l.b16 %v91
    %v323 = vunpack.c.l.b16 %v92
    %v324 = vunpack.c.l.b16 %v93
    %v325 = vunpack.c.l.b16 %v94
    %v326 = vunpack.c.l.b16 %v95
    %v327 = vunpack.c.l.b16 %v96
    %v328 = vunpack.c.l.b16 %v97
    %v329 = vunpack.c.l.b16 %v98
    %v330 = vunpack.c.l.b16 %v99
    %v331 = vunpack.c.l.b16 %v100
    %v332 = vpack.c.b16 %v301, %v300
    %v333 = vpack.c.b16 %v303, %v302
    %v334 = vpack.c.b16 %v305, %v304
    %v335 = vpack.c.b16 %v307, %v306
    %v336 = vpack.c.b16 %v309, %v308
    %v337 = vpack.c.b16 %v311, %v310
    %v338 = vpack.c.b16 %v313, %v312
    %v339 = vpack.c.b16 %v315, %v314
    %v340 = vpack.c.b16 %v317, %v316
    %v341 = vpack.c.b16 %v319, %v318
    %v342 = vpack.c.b16 %v321, %v320
    %v343 = vpack.c.b16 %v323, %v322
    %v344 = vpack.c.b16 %v325, %v324
    %v345 = vpack.c.b16 %v327, %v326
    %v346 = vpack.c.b16 %v329, %v328
    %v347 = vpack.c.b16 %v331, %v330
    %364 = vmatprep.subr.bf16.mxu0 0
    %365 = vmatpush1.bf16.msra.mxu0 %v339
    %366 = vmatprep.subr.bf16.mxu0 0
    %367 = vmatpush1.bf16.msra.mxu0 %v338
    %368 = vmatprep.subr.bf16.mxu0 0
    %369 = vmatpush1.bf16.msra.mxu0 %v337
    %370 = vmatprep.subr.bf16.mxu0 0
    %371 = vmatpush1.bf16.msra.mxu0 %v336
    %372 = vmatprep.subr.bf16.mxu0 0
    %373 = vmatpush1.bf16.msra.mxu0 %v335
    %374 = vmatprep.subr.bf16.mxu0 0
    %375 = vmatpush1.bf16.msra.mxu0 %v334
    %376 = vmatprep.subr.bf16.mxu0 0
    %377 = vmatpush1.bf16.msra.mxu0 %v333
    %378 = vmatprep.subr.bf16.mxu0 0
    %379 = vmatpush1.bf16.msra.mxu0 %v332
    %380 = vmatprep.subr.bf16.mxu0 0
    %381 = vmatpush2.bf16.msra.mxu0 %v347
    %382 = vmatprep.subr.bf16.mxu0 0
    %383 = vmatpush2.bf16.msra.mxu0 %v346
    %384 = vmatprep.subr.bf16.mxu0 0
    %385 = vmatpush2.bf16.msra.mxu0 %v345
    %386 = vmatprep.subr.bf16.mxu0 0
    %387 = vmatpush2.bf16.msra.mxu0 %v344
    %388 = vmatprep.subr.bf16.mxu0 0
    %389 = vmatpush2.bf16.msra.mxu0 %v343
    %390 = vmatprep.subr.bf16.mxu0 0
    %391 = vmatpush2.bf16.msra.mxu0 %v342
    %392 = vmatprep.subr.bf16.mxu0 0
    %393 = vmatpush2.bf16.msra.mxu0 %v341
    %394 = vmatprep.subr.bf16.mxu0 0
    %395 = vmatpush2.bf16.msra.mxu0 %v340
    %396 = vmatprep.mubr.bf16.mxu0 %v205
    %397 = vmatmul.mubr.bf16.gmra.mxu0 %v204
    %v398 = vpop.f32.mrf.mxu0
    %v399 = vadd.f32 %v106, %v398
    %v400 = vpop.f32.mrf.mxu0
    %v401 = vpop.f32.mrf.mxu0
    %v402 = vadd.f32 %v106, %v401
    %v403 = vpop.f32.mrf.mxu0
    %404 = vmatprep.mubr.bf16.mxu0 %v207
    %405 = vmatmul.mubr.bf16.gmra.mxu0 %v206
    %v406 = vpop.f32.mrf.mxu0
    %v407 = vadd.f32 %v106, %v406
    %v408 = vpop.f32.mrf.mxu0
    %v409 = vpop.f32.mrf.mxu0
    %v410 = vadd.f32 %v106, %v409
    %v411 = vpop.f32.mrf.mxu0
    %412 = vmatprep.mubr.bf16.mxu0 %v209
    %413 = vmatmul.mubr.bf16.gmra.mxu0 %v208
    %v414 = vpop.f32.mrf.mxu0
    %v415 = vadd.f32 %v106, %v414
    %v416 = vpop.f32.mrf.mxu0
    %v417 = vpop.f32.mrf.mxu0
    %v418 = vadd.f32 %v106, %v417
    %v419 = vpop.f32.mrf.mxu0
    %420 = vmatprep.mubr.bf16.mxu0 %v211
    %421 = vmatmul.mubr.bf16.gmra.mxu0 %v210
    %v422 = vpop.f32.mrf.mxu0
    %v423 = vadd.f32 %v106, %v422
    %v424 = vpop.f32.mrf.mxu0
    %v425 = vpop.f32.mrf.mxu0
    %v426 = vadd.f32 %v106, %v425
    %v427 = vpop.f32.mrf.mxu0
    %428 = vmatprep.mubr.bf16.mxu0 %v213
    %429 = vmatmul.mubr.bf16.gmra.mxu0 %v212
    %v430 = vpop.f32.mrf.mxu0
    %v431 = vadd.f32 %v106, %v430
    %v432 = vpop.f32.mrf.mxu0
    %v433 = vpop.f32.mrf.mxu0
    %v434 = vadd.f32 %v106, %v433
    %v435 = vpop.f32.mrf.mxu0
    %436 = vmatprep.mubr.bf16.mxu0 %v215
    %437 = vmatmul.mubr.bf16.gmra.mxu0 %v214
    %v438 = vpop.f32.mrf.mxu0
    %v439 = vadd.f32 %v106, %v438
    %v440 = vpop.f32.mrf.mxu0
    %v441 = vpop.f32.mrf.mxu0
    %v442 = vadd.f32 %v106, %v441
    %v443 = vpop.f32.mrf.mxu0
    %444 = vmatprep.mubr.bf16.mxu0 %v217
    %445 = vmatmul.mubr.bf16.gmra.mxu0 %v216
    %v446 = vpop.f32.mrf.mxu0
    %v447 = vadd.f32 %v106, %v446
    %v448 = vpop.f32.mrf.mxu0
    %v449 = vpop.f32.mrf.mxu0
    %v450 = vadd.f32 %v106, %v449
    %v451 = vpop.f32.mrf.mxu0
    %452 = vmatprep.mubr.bf16.mxu0 %v219
    %453 = vmatmul.mubr.bf16.gmra.mxu0 %v218
    %v454 = vpop.f32.mrf.mxu0
    %v455 = vadd.f32 %v106, %v454
    %v456 = vpop.f32.mrf.mxu0
    %v457 = vpop.f32.mrf.mxu0
    %v458 = vadd.f32 %v106, %v457
    %v459 = vpop.f32.mrf.mxu0
    %460 = vmatprep.mubr.bf16.mxu0 %v221
    %461 = vmatmul.mubr.bf16.gmra.mxu0 %v220
    %v462 = vpop.f32.mrf.mxu0
    %v463 = vadd.f32 %v106, %v462
    %v464 = vpop.f32.mrf.mxu0
    %v465 = vpop.f32.mrf.mxu0
    %v466 = vadd.f32 %v106, %v465
    %v467 = vpop.f32.mrf.mxu0
    %468 = vmatprep.mubr.bf16.mxu0 %v223
    %469 = vmatmul.mubr.bf16.gmra.mxu0 %v222
    %v470 = vpop.f32.mrf.mxu0
    %v471 = vadd.f32 %v106, %v470
    %v472 = vpop.f32.mrf.mxu0
    %v473 = vpop.f32.mrf.mxu0
    %v474 = vadd.f32 %v106, %v473
    %v475 = vpop.f32.mrf.mxu0
    %476 = vmatprep.mubr.bf16.mxu0 %v225
    %477 = vmatmul.mubr.bf16.gmra.mxu0 %v224
    %v478 = vpop.f32.mrf.mxu0
    %v479 = vadd.f32 %v106, %v478
    %v480 = vpop.f32.mrf.mxu0
    %v481 = vpop.f32.mrf.mxu0
    %v482 = vadd.f32 %v106, %v481
    %v483 = vpop.f32.mrf.mxu0
    %484 = vmatprep.mubr.bf16.mxu0 %v227
    %485 = vmatmul.mubr.bf16.gmra.mxu0 %v226
    %v486 = vpop.f32.mrf.mxu0
    %v487 = vadd.f32 %v106, %v486
    %v488 = vpop.f32.mrf.mxu0
    %v489 = vpop.f32.mrf.mxu0
    %v490 = vadd.f32 %v106, %v489
    %v491 = vpop.f32.mrf.mxu0
    %492 = vmatprep.mubr.bf16.mxu0 %v229
    %493 = vmatmul.mubr.bf16.gmra.mxu0 %v228
    %v494 = vpop.f32.mrf.mxu0
    %v495 = vadd.f32 %v106, %v494
    %v496 = vpop.f32.mrf.mxu0
    %v497 = vpop.f32.mrf.mxu0
    %v498 = vadd.f32 %v106, %v497
    %v499 = vpop.f32.mrf.mxu0
    %500 = vmatprep.mubr.bf16.mxu0 %v231
    %501 = vmatmul.mubr.bf16.gmra.mxu0 %v230
    %v502 = vpop.f32.mrf.mxu0
    %v503 = vadd.f32 %v106, %v502
    %v504 = vpop.f32.mrf.mxu0
    %v505 = vpop.f32.mrf.mxu0
    %v506 = vadd.f32 %v106, %v505
    %v507 = vpop.f32.mrf.mxu0
    %508 = vmatprep.mubr.bf16.mxu0 %v233
    %509 = vmatmul.mubr.bf16.gmra.mxu0 %v232
    %v510 = vpop.f32.mrf.mxu0
    %v511 = vadd.f32 %v106, %v510
    %v512 = vpop.f32.mrf.mxu0
    %v513 = vpop.f32.mrf.mxu0
    %v514 = vadd.f32 %v106, %v513
    %v515 = vpop.f32.mrf.mxu0
    %516 = vmatprep.mubr.bf16.mxu0 %v235
    %517 = vmatmul.mubr.bf16.gmra.mxu0 %v234
    %v518 = vpop.f32.mrf.mxu0
    %v519 = vadd.f32 %v106, %v518
    %v520 = vpop.f32.mrf.mxu0
    %v521 = vpop.f32.mrf.mxu0
    %v522 = vadd.f32 %v106, %v521
    %v523 = vpop.f32.mrf.mxu0
    %524 = vdwg.mxu0
    %v525 = vmax.f32 %v399, 0.0
    %v526 = vmax.f32 %v402, 0.0
    %v527 = vmax.f32 %v407, 0.0
    %v528 = vmax.f32 %v410, 0.0
    %v529 = vmax.f32 %v415, 0.0
    %v530 = vmax.f32 %v418, 0.0
    %v531 = vmax.f32 %v423, 0.0
    %v532 = vmax.f32 %v426, 0.0
    %v533 = vmax.f32 %v431, 0.0
    %v534 = vmax.f32 %v434, 0.0
    %v535 = vmax.f32 %v439, 0.0
    %v536 = vmax.f32 %v442, 0.0
    %v537 = vmax.f32 %v447, 0.0
    %v538 = vmax.f32 %v450, 0.0
    %v539 = vmax.f32 %v455, 0.0
    %v540 = vmax.f32 %v458, 0.0
    %v541 = vmax.f32 %v463, 0.0
    %v542 = vmax.f32 %v466, 0.0
    %v543 = vmax.f32 %v471, 0.0
    %v544 = vmax.f32 %v474, 0.0
    %v545 = vmax.f32 %v479, 0.0
    %v546 = vmax.f32 %v482, 0.0
    %v547 = vmax.f32 %v487, 0.0
    %v548 = vmax.f32 %v490, 0.0
    %v549 = vmax.f32 %v495, 0.0
    %v550 = vmax.f32 %v498, 0.0
    %v551 = vmax.f32 %v503, 0.0
    %v552 = vmax.f32 %v506, 0.0
    %v553 = vmax.f32 %v511, 0.0
    %v554 = vmax.f32 %v514, 0.0
    %v555 = vmax.f32 %v519, 0.0
    %v556 = vmax.f32 %v522, 0.0
    %v557 = vpack.c.bf16 %v526, %v525
    %v558 = vpack.c.bf16 %v528, %v527
    %v559 = vpack.c.bf16 %v530, %v529
    %v560 = vpack.c.bf16 %v532, %v531
    %v561 = vpack.c.bf16 %v534, %v533
    %v562 = vpack.c.bf16 %v536, %v535
    %v563 = vpack.c.bf16 %v538, %v537
    %v564 = vpack.c.bf16 %v540, %v539
    %v565 = vpack.c.bf16 %v542, %v541
    %v566 = vpack.c.bf16 %v544, %v543
    %v567 = vpack.c.bf16 %v546, %v545
    %v568 = vpack.c.bf16 %v548, %v547
    %v569 = vpack.c.bf16 %v550, %v549
    %v570 = vpack.c.bf16 %v552, %v551
    %v571 = vpack.c.bf16 %v554, %v553
    %v572 = vpack.c.bf16 %v556, %v555
    %573 = vmatprep.subr.bf16.mxu0 0
    %574 = vmatpush1.bf16.msra.mxu0 %v564
    %575 = vmatprep.subr.bf16.mxu0 0
    %576 = vmatpush1.bf16.msra.mxu0 %v563
    %577 = vmatprep.subr.bf16.mxu0 0
    %578 = vmatpush1.bf16.msra.mxu0 %v562
    %579 = vmatprep.subr.bf16.mxu0 0
    %580 = vmatpush1.bf16.msra.mxu0 %v561
    %581 = vmatprep.subr.bf16.mxu0 0
    %582 = vmatpush1.bf16.msra.mxu0 %v560
    %583 = vmatprep.subr.bf16.mxu0 0
    %584 = vmatpush1.bf16.msra.mxu0 %v559
    %585 = vmatprep.subr.bf16.mxu0 0
    %586 = vmatpush1.bf16.msra.mxu0 %v558
    %587 = vmatprep.subr.bf16.mxu0 0
    %588 = vmatpush1.bf16.msra.mxu0 %v557
    %589 = vmatprep.subr.bf16.mxu0 0
    %590 = vmatpush2.bf16.msra.mxu0 %v572
    %591 = vmatprep.subr.bf16.mxu0 0
    %592 = vmatpush2.bf16.msra.mxu0 %v571
    %593 = vmatprep.subr.bf16.mxu0 0
    %594 = vmatpush2.bf16.msra.mxu0 %v570
    %595 = vmatprep.subr.bf16.mxu0 0
    %596 = vmatpush2.bf16.msra.mxu0 %v569
    %597 = vmatprep.subr.bf16.mxu0 0
    %598 = vmatpush2.bf16.msra.mxu0 %v568
    %599 = vmatprep.subr.bf16.mxu0 0
    %600 = vmatpush2.bf16.msra.mxu0 %v567
    %601 = vmatprep.subr.bf16.mxu0 0
    %602 = vmatpush2.bf16.msra.mxu0 %v566
    %603 = vmatprep.subr.bf16.mxu0 0
    %604 = vmatpush2.bf16.msra.mxu0 %v565
    %605 = vmatprep.mubr.bf16.mxu0 %v205
    %606 = vmatmul.mubr.bf16.gmra.mxu0 %v204
    %v607 = vpop.f32.mrf.mxu0
    %v608 = vadd.f32 0.0, %v607
    %v609 = vpop.f32.mrf.mxu0
    %v610 = vpop.f32.mrf.mxu0
    %v611 = vadd.f32 0.0, %v610
    %v612 = vpop.f32.mrf.mxu0
    %613 = vmatprep.mubr.bf16.mxu0 %v207
    %614 = vmatmul.mubr.bf16.gmra.mxu0 %v206
    %v615 = vpop.f32.mrf.mxu0
    %v616 = vadd.f32 0.0, %v615
    %v617 = vpop.f32.mrf.mxu0
    %v618 = vpop.f32.mrf.mxu0
    %v619 = vadd.f32 0.0, %v618
    %v620 = vpop.f32.mrf.mxu0
    %621 = vmatprep.mubr.bf16.mxu0 %v209
    %622 = vmatmul.mubr.bf16.gmra.mxu0 %v208
    %v623 = vpop.f32.mrf.mxu0
    %v624 = vadd.f32 0.0, %v623
    %v625 = vpop.f32.mrf.mxu0
    %v626 = vpop.f32.mrf.mxu0
    %v627 = vadd.f32 0.0, %v626
    %v628 = vpop.f32.mrf.mxu0
    %629 = vmatprep.mubr.bf16.mxu0 %v211
    %630 = vmatmul.mubr.bf16.gmra.mxu0 %v210
    %v631 = vpop.f32.mrf.mxu0
    %v632 = vadd.f32 0.0, %v631
    %v633 = vpop.f32.mrf.mxu0
    %v634 = vpop.f32.mrf.mxu0
    %v635 = vadd.f32 0.0, %v634
    %v636 = vpop.f32.mrf.mxu0
    %637 = vmatprep.mubr.bf16.mxu0 %v213
    %638 = vmatmul.mubr.bf16.gmra.mxu0 %v212
    %v639 = vpop.f32.mrf.mxu0
    %v640 = vadd.f32 0.0, %v639
    %v641 = vpop.f32.mrf.mxu0
    %v642 = vpop.f32.mrf.mxu0
    %v643 = vadd.f32 0.0, %v642
    %v644 = vpop.f32.mrf.mxu0
    %645 = vmatprep.mubr.bf16.mxu0 %v215
    %646 = vmatmul.mubr.bf16.gmra.mxu0 %v214
    %v647 = vpop.f32.mrf.mxu0
    %v648 = vadd.f32 0.0, %v647
    %v649 = vpop.f32.mrf.mxu0
    %v650 = vpop.f32.mrf.mxu0
    %v651 = vadd.f32 0.0, %v650
    %v652 = vpop.f32.mrf.mxu0
    %653 = vmatprep.mubr.bf16.mxu0 %v217
    %654 = vmatmul.mubr.bf16.gmra.mxu0 %v216
    %v655 = vpop.f32.mrf.mxu0
    %v656 = vadd.f32 0.0, %v655
    %v657 = vpop.f32.mrf.mxu0
    %v658 = vpop.f32.mrf.mxu0
    %v659 = vadd.f32 0.0, %v658
    %v660 = vpop.f32.mrf.mxu0
    %661 = vmatprep.mubr.bf16.mxu0 %v219
    %662 = vmatmul.mubr.bf16.gmra.mxu0 %v218
    %v663 = vpop.f32.mrf.mxu0
    %v664 = vadd.f32 0.0, %v663
    %v665 = vpop.f32.mrf.mxu0
    %v666 = vpop.f32.mrf.mxu0
    %v667 = vadd.f32 0.0, %v666
    %v668 = vpop.f32.mrf.mxu0
    %669 = vmatprep.mubr.bf16.mxu0 %v221
    %670 = vmatmul.mubr.bf16.gmra.mxu0 %v220
    %v671 = vpop.f32.mrf.mxu0
    %v672 = vadd.f32 0.0, %v671
    %v673 = vpop.f32.mrf.mxu0
    %v674 = vpop.f32.mrf.mxu0
    %v675 = vadd.f32 0.0, %v674
    %v676 = vpop.f32.mrf.mxu0
    %677 = vmatprep.mubr.bf16.mxu0 %v223
    %678 = vmatmul.mubr.bf16.gmra.mxu0 %v222
    %v679 = vpop.f32.mrf.mxu0
    %v680 = vadd.f32 0.0, %v679
    %v681 = vpop.f32.mrf.mxu0
    %v682 = vpop.f32.mrf.mxu0
    %v683 = vadd.f32 0.0, %v682
    %v684 = vpop.f32.mrf.mxu0
    %685 = vmatprep.mubr.bf16.mxu0 %v225
    %686 = vmatmul.mubr.bf16.gmra.mxu0 %v224
    %v687 = vpop.f32.mrf.mxu0
    %v688 = vadd.f32 0.0, %v687
    %v689 = vpop.f32.mrf.mxu0
    %v690 = vpop.f32.mrf.mxu0
    %v691 = vadd.f32 0.0, %v690
    %v692 = vpop.f32.mrf.mxu0
    %693 = vmatprep.mubr.bf16.mxu0 %v227
    %694 = vmatmul.mubr.bf16.gmra.mxu0 %v226
    %v695 = vpop.f32.mrf.mxu0
    %v696 = vadd.f32 0.0, %v695
    %v697 = vpop.f32.mrf.mxu0
    %v698 = vpop.f32.mrf.mxu0
    %v699 = vadd.f32 0.0, %v698
    %v700 = vpop.f32.mrf.mxu0
    %701 = vmatprep.mubr.bf16.mxu0 %v229
    %702 = vmatmul.mubr.bf16.gmra.mxu0 %v228
    %v703 = vpop.f32.mrf.mxu0
    %v704 = vadd.f32 0.0, %v703
    %v705 = vpop.f32.mrf.mxu0
    %v706 = vpop.f32.mrf.mxu0
    %v707 = vadd.f32 0.0, %v706
    %v708 = vpop.f32.mrf.mxu0
    %709 = vmatprep.mubr.bf16.mxu0 %v231
    %710 = vmatmul.mubr.bf16.gmra.mxu0 %v230
    %v711 = vpop.f32.mrf.mxu0
    %v712 = vadd.f32 0.0, %v711
    %v713 = vpop.f32.mrf.mxu0
    %v714 = vpop.f32.mrf.mxu0
    %v715 = vadd.f32 0.0, %v714
    %v716 = vpop.f32.mrf.mxu0
    %717 = vmatprep.mubr.bf16.mxu0 %v233
    %718 = vmatmul.mubr.bf16.gmra.mxu0 %v232
    %v719 = vpop.f32.mrf.mxu0
    %v720 = vadd.f32 0.0, %v719
    %v721 = vpop.f32.mrf.mxu0
    %v722 = vpop.f32.mrf.mxu0
    %v723 = vadd.f32 0.0, %v722
    %v724 = vpop.f32.mrf.mxu0
    %725 = vmatprep.mubr.bf16.mxu0 %v235
    %726 = vmatmul.mubr.bf16.gmra.mxu0 %v234
    %v727 = vpop.f32.mrf.mxu0
    %v728 = vadd.f32 0.0, %v727
    %v729 = vpop.f32.mrf.mxu0
    %v730 = vpop.f32.mrf.mxu0
    %v731 = vadd.f32 0.0, %v730
    %v732 = vpop.f32.mrf.mxu0
    %733 = vdwg.mxu0
    %v734 = vld [vmem:[%s3] sm:$0x1]
    %s735 = sld [smem:[#allocation2]]
    %v736 = vstv %s735
    %vm737 = vcmask 261120
    %v739 = vsel %vm737, %v734, 0
    %v742 = vsel %vm737, %v608, 0
    %v745 = vsel %vm737, %v611, 0
    %v748 = vsel %vm737, %v616, 0
    %v751 = vsel %vm737, %v619, 0
    %v754 = vsel %vm737, %v624, 0
    %v757 = vsel %vm737, %v627, 0
    %v760 = vsel %vm737, %v632, 0
    %v763 = vsel %vm737, %v635, 0
    %v766 = vsel %vm737, %v640, 0
    %v769 = vsel %vm737, %v643, 0
    %v772 = vsel %vm737, %v648, 0
    %v775 = vsel %vm737, %v651, 0
    %v778 = vsel %vm737, %v656, 0
    %v781 = vsel %vm737, %v659, 0
    %v784 = vsel %vm737, %v664, 0
    %v787 = vsel %vm737, %v667, 0
    %v790 = vsel %vm737, %v672, 0
    %v793 = vsel %vm737, %v675, 0
    %v796 = vsel %vm737, %v680, 0
    %v799 = vsel %vm737, %v683, 0
    %v802 = vsel %vm737, %v688, 0
    %v805 = vsel %vm737, %v691, 0
    %v808 = vsel %vm737, %v696, 0
    %v811 = vsel %vm737, %v699, 0
    %v814 = vsel %vm737, %v704, 0
    %v817 = vsel %vm737, %v707, 0
    %v820 = vsel %vm737, %v712, 0
    %v823 = vsel %vm737, %v715, 0
    %v826 = vsel %vm737, %v720, 0
    %v829 = vsel %vm737, %v723, 0
    %v832 = vsel %vm737, %v728, 0
    %v835 = vsel %vm737, %v731, 0
    %837 = vmatprep.subr.mxu0 0.0
    %838 = vmatpush1.xpose.msra.mxu0 %v787
    %839 = vmatprep.subr.mxu0 0.0
    %840 = vmatpush1.xpose.msra.mxu0 %v784
    %841 = vmatprep.subr.mxu0 0.0
    %842 = vmatpush1.xpose.msra.mxu0 %v781
    %843 = vmatprep.subr.mxu0 0.0
    %844 = vmatpush1.xpose.msra.mxu0 %v778
    %845 = vmatprep.subr.mxu0 0.0
    %846 = vmatpush1.xpose.msra.mxu0 %v775
    %847 = vmatprep.subr.mxu0 0.0
    %848 = vmatpush1.xpose.msra.mxu0 %v772
    %849 = vmatprep.subr.mxu0 0.0
    %850 = vmatpush1.xpose.msra.mxu0 %v769
    %851 = vmatprep.subr.mxu0 0.0
    %852 = vmatpush1.xpose.msra.mxu0 %v766
    %853 = vmatprep.subr.mxu0 0.0
    %854 = vmatpush1.xpose.msra.mxu0 %v763
    %855 = vmatprep.subr.mxu0 0.0
    %856 = vmatpush1.xpose.msra.mxu0 %v760
    %857 = vmatprep.subr.mxu0 0.0
    %858 = vmatpush1.xpose.msra.mxu0 %v757
    %859 = vmatprep.subr.mxu0 0.0
    %860 = vmatpush1.xpose.msra.mxu0 %v754
    %861 = vmatprep.subr.mxu0 0.0
    %862 = vmatpush1.xpose.msra.mxu0 %v751
    %863 = vmatprep.subr.mxu0 0.0
    %864 = vmatpush1.xpose.msra.mxu0 %v748
    %865 = vmatprep.subr.mxu0 0.0
    %866 = vmatpush1.xpose.msra.mxu0 %v745
    %867 = vmatprep.subr.mxu0 0.0
    %868 = vmatpush1.xpose.msra.mxu0 %v742
    %869 = vmatprep.subr.mxu0 0.0
    %870 = vmatpush2.xpose.msra.mxu0 %v835
    %871 = vmatprep.subr.mxu0 0.0
    %872 = vmatpush2.xpose.msra.mxu0 %v832
    %873 = vmatprep.subr.mxu0 0.0
    %874 = vmatpush2.xpose.msra.mxu0 %v829
    %875 = vmatprep.subr.mxu0 0.0
    %876 = vmatpush2.xpose.msra.mxu0 %v826
    %877 = vmatprep.subr.mxu0 0.0
    %878 = vmatpush2.xpose.msra.mxu0 %v823
    %879 = vmatprep.subr.mxu0 0.0
    %880 = vmatpush2.xpose.msra.mxu0 %v820
    %881 = vmatprep.subr.mxu0 0.0
    %882 = vmatpush2.xpose.msra.mxu0 %v817
    %883 = vmatprep.subr.mxu0 0.0
    %884 = vmatpush2.xpose.msra.mxu0 %v814
    %885 = vmatprep.subr.mxu0 0.0
    %886 = vmatpush2.xpose.msra.mxu0 %v811
    %887 = vmatprep.subr.mxu0 0.0
    %888 = vmatpush2.xpose.msra.mxu0 %v808
    %889 = vmatprep.subr.mxu0 0.0
    %890 = vmatpush2.xpose.msra.mxu0 %v805
    %891 = vmatprep.subr.mxu0 0.0
    %892 = vmatpush2.xpose.msra.mxu0 %v802
    %893 = vmatprep.subr.mxu0 0.0
    %894 = vmatpush2.xpose.msra.mxu0 %v799
    %895 = vmatprep.subr.mxu0 0.0
    %896 = vmatpush2.xpose.msra.mxu0 %v796
    %897 = vmatprep.subr.mxu0 0.0
    %898 = vmatpush2.xpose.msra.mxu0 %v793
    %899 = vmatprep.subr.mxu0 0.0
    %900 = vmatpush2.xpose.msra.mxu0 %v790
    %901 = vmatprep.mubr.f32.mxu0 0.0
    %902 = vmatmul.mubr.f32.gmra.mxu0 %v739
    %v903 = vpop.f32.mrf.mxu0
    %v904 = vadd.f32 %v736, %v903
    %v905 = vpop.f32.mrf.mxu0
    %v906 = vadd.f32 %v736, %v905
    %907 = vdwg.mxu0
    %v908 = vxor.u32 %v904, 2147483648
    %v909 = vxor.u32 %v906, 2147483648
    %v910 = vmul.f32 %v908, 1.442695
    %v911 = vpow.pop %v910
    %v912 = vmul.f32 %v909, 1.442695
    %v913 = vpow.pop %v912
    %v914 = vadd.f32 %v911, 1.0
    %v915 = vadd.f32 %v913, 1.0
    %v916 = vrcp.pop %v914
    %v917 = vmul.f32 1.0, %v916
    %v918 = vrcp.pop %v915
    %v919 = vmul.f32 1.0, %v918
    %v922 = vcombine.low %v917, %v919
    %v924 = vunpack.c.l.s4 1966171168
    %v925 = vunpack.c.0.s8 %v924
    %v926 = vlaneseq
    %v927 = vshrl.u32 %v926, 7
    %v928 = vsub.s32 %v925, %v927
    %v929 = vrot.slane %v922, %v928
    %v931 = vunpack.c.l.s4 1966171168
    %v932 = vunpack.c.0.s8 %v931
    %v933 = vlaneseq
    %v934 = vshrl.u32 %v933, 7
    %v935 = vsub.s32 %v932, %v934
    %v936 = vrot.slane %v929, %v935
    %v938 = vlaneseq
    %vm939 = vcmp.ge.s32.totalorder %v938, 0
    %vm940 = vcmp.lt.s32.totalorder %v938, 256
    %vm941 = vmand %vm939, %vm940
    %942 = vst.msk [vmem:[#allocation6] sm:$0x3] %vm941, %v936
    // Predicated region
    $region26: #{tpu_custom_call.1} parent=1 // pred_check
      _
    $region27: #{tpu_custom_call.1} parent=1 // pred_check_branch
      %944 = sbr.rel (0) target = $region29
    $region28: #{tpu_custom_call.1} parent=1 // pred_region
      %s946 = ssub.s32 32, 32
      %947 = vsyncadd [#allocation5], %s946
      %s949 = sshll.u32 [#allocation6], 4
      %s950 = int_to_ptr.vmem [resolvable:$true] %s949
      %952 = dma.vmem_to_hbm [thread:$0]  %s950, 32, %s5, [#allocation5]
    $region29: #{tpu_custom_call.1} parent=1 // pred_fallthru
      _
    // Predicated region
    $region30: #{tpu_custom_call.1} parent=1 // pred_check
      _
    $region31: #{tpu_custom_call.1} parent=1 // pred_check_branch
      %954 = sbr.rel (0) target = $region33
    $region32: #{tpu_custom_call.1} parent=1 // pred_region
      %955 = dma.done [#allocation5], 32
    $region33: #{tpu_custom_call.1} parent=1 // pred_fallthru
      _
    %956 = vsyncpa [#allocation4], 1
    %957 = vsyncpa [#allocation5], 1

</llo_original>
